<compile_context>
chip_gen: v7x
topology: tpu7x:2x2x1
jax: 0.10.0
libtpu: 0.0.40
codegen_flags: <defaults>
</compile_context>

<pallas_src>
import functools

import jax
import jax.numpy as jnp
from jax.experimental import pallas as pl
from jax.experimental.pallas import tpu as pltpu


def _round_up(a, m):
    return (a + m - 1) // m * m


def _fc_layernorm_kernel(x_ref, w_ref, p_ref, o_ref, *, eps, matmul_dtype):
    # x_ref: (ts, D)   w_ref: (D, O)   p_ref: (3, O) f32 = [bias; gamma; beta]
    # o_ref: (ts, O)
    x = x_ref[...]
    if matmul_dtype is not None:
        # In-kernel cast rides the VPU slot (free); avoids a wrapper-level
        # astype that would re-read/re-write the whole activation in HBM.
        x = x.astype(matmul_dtype)

    # Linear: y = x @ W + b  (MXU matmul, f32 accumulate)
    y = jnp.dot(x, w_ref[...], preferred_element_type=jnp.float32)
    p = p_ref[...]
    y = y + p[0:1, :]

    # LayerNorm over the feature axis, eps=1e-12, one-pass statistics.
    mean = jnp.mean(y, axis=-1, keepdims=True)
    mean_sq = jnp.mean(y * y, axis=-1, keepdims=True)
    var = jnp.maximum(mean_sq - mean * mean, 0.0)
    y = (y - mean) * jax.lax.rsqrt(var + eps)
    y = y * p[1:2, :] + p[2:3, :]

    # Dropout in eval mode is identity.
    o_ref[...] = y.astype(o_ref.dtype)


def fc_layernorm_transposed(x_bsd, w, b, gamma, beta, *, eps=1e-12,
                            seq_tile=1024, matmul_dtype=jnp.bfloat16,
                            out_dtype=None):
    """Computes LayerNorm(x @ w + b) * gamma + beta with the batch/seq transpose
    folded into the BlockSpec index maps.

    x_bsd: [B, S, D]  (DistilBERT last_hidden_state, untransposed)
    returns: [S, B, O]
    """
    B, S, D = x_bsd.shape
    O = w.shape[1]
    out_dtype = x_bsd.dtype if out_dtype is None else out_dtype

    # Lane-dense output stores: each output block's last dim is O, which must be
    # a multiple of 128 unless B == 1 (then the block spans the full last dim).
    assert O % 128 == 0 or B == 1, (
        "outdim must be a multiple of 128 when batch > 1 (lane-dense output "
        "blocks); pad the fc/layer_norm parameters to a 128 multiple.")

    # Even-split sequence tile (multiple of 8); bounds edge waste to <8 rows.
    n_tiles = max(1, pl.cdiv(S, seq_tile))
    ts = _round_up(pl.cdiv(S, n_tiles), 8)
    # Keep >= 4 total grid steps when possible: v7x shards "parallel" axes
    # across its 2 TensorCores and each core needs >= 2 steps so the
    # double-buffer pipeline can overlap DMA with compute.
    while pl.cdiv(S, ts) * B < 4 and ts > 8:
        ts = _round_up(pl.cdiv(ts, 2), 8)
    num_seq = pl.cdiv(S, ts)

    # Weight cast in the wrapper is tiny (D*O) and halves its per-step DMA.
    # x is intentionally NOT cast here (see in-kernel cast above).
    if matmul_dtype is not None:
        w = w.astype(matmul_dtype)

    # Pack bias / gamma / beta into one (3, O) f32 array: single DMA stream.
    pvec = jnp.stack([b.astype(jnp.float32),
                      gamma.astype(jnp.float32),
                      beta.astype(jnp.float32)], axis=0)

    kernel = functools.partial(_fc_layernorm_kernel, eps=eps,
                               matmul_dtype=matmul_dtype)

    # VMEM budget: double-buffered x tile + weight + output tile + params,
    # plus f32 compute temporaries; clamp to [16 MiB, 64 MiB] (v7x physical).
    in_bytes = jnp.dtype(matmul_dtype).itemsize if matmul_dtype is not None \
        else jnp.dtype(x_bsd.dtype).itemsize
    vmem_est = (2 * ts * D * jnp.dtype(x_bsd.dtype).itemsize
                + 2 * D * O * in_bytes
                + 2 * ts * O * jnp.dtype(out_dtype).itemsize
                + 2 * 8 * O * 4
                + 4 * ts * O * 4)
    vmem_limit = int(min(64 * 2**20, max(16 * 2**20, int(vmem_est * 1.5))))

    # Output is an [S, B*O] slab: block (si, bi) holds sequence rows
    # si*ts..(si+1)*ts for batch element bi, i.e. exactly text_memory[s, bi, :]
    # after a free reshape to [S, B, O].  Ragged S is handled by Pallas's
    # partial edge blocks (masked output writes), no padded HBM copy.
    out = pl.pallas_call(
        kernel,
        out_shape=jax.ShapeDtypeStruct((S, B * O), out_dtype),
        grid_spec=pltpu.PrefetchScalarGridSpec(
            num_scalar_prefetch=0,
            grid=(num_seq, B),
            in_specs=[
                # x[bi, si*ts:(si+1)*ts, :] -> kernel sees (ts, D); batch squeezed.
                pl.BlockSpec((None, ts, D), lambda si, bi: (bi, si, 0)),
                pl.BlockSpec((D, O), lambda si, bi: (0, 0)),   # resident weight
                pl.BlockSpec((3, O), lambda si, bi: (0, 0)),   # bias/gamma/beta
            ],
            out_specs=pl.BlockSpec((ts, O), lambda si, bi: (si, bi)),
        ),
        compiler_params=pltpu.CompilerParams(
            dimension_semantics=("parallel", "parallel"),
            vmem_limit_bytes=vmem_limit,
        ),
    )(x_bsd, w, pvec)

    # Free reshape to [S, B, O].
    return out.reshape(S, B, O)


def text_encoder_forward(last_hidden_state, attention_mask, params, *,
                         seq_tile=1024, matmul_dtype=jnp.bfloat16,
                         out_dtype=None):
    """Mirror of TextEncoder.forward, starting from DistilBERT's last_hidden_state.

    last_hidden_state: [B, S, D]
    attention_mask:    [B, S] int32 (1 = real token, 0 = padding)
    returns (text_attention_mask [B,S] bool, text_memory [S,B,O], None)
    """
    text_attention_mask = attention_mask != 1   # .ne(1), plain JAX glue

    text_memory = fc_layernorm_transposed(
        last_hidden_state,
        params["fc_w"],
        params["fc_b"],
        params["ln_gamma"],
        params["ln_beta"],
        eps=1e-12,
        seq_tile=seq_tile,
        matmul_dtype=matmul_dtype,
        out_dtype=out_dtype,
    )
    return text_attention_mask, text_memory, None


def init_params(key, in_dim, out_dim, dtype=jnp.float32):
    k_w, k_b = jax.random.split(key)
    bound = 1.0 / (in_dim ** 0.5)
    fc_w = jax.random.uniform(k_w, (in_dim, out_dim), dtype, -bound, bound)
    fc_b = jax.random.uniform(k_b, (out_dim,), dtype, -bound, bound)
    ln_gamma = jnp.ones((out_dim,), dtype)
    ln_beta = jnp.zeros((out_dim,), dtype)
    return {"fc_w": fc_w, "fc_b": fc_b, "ln_gamma": ln_gamma, "ln_beta": ln_beta}


def _reference(x_bsd, p, matmul_dtype=None):
    # Pure-JAX reference of the Pallas hot path (transpose -> fc -> LayerNorm).
    x_t = jnp.transpose(x_bsd, (1, 0, 2))
    w = p["fc_w"]
    if matmul_dtype is not None:
        x_t = x_t.astype(matmul_dtype)
        w = w.astype(matmul_dtype)
    y = jnp.einsum("sbd,do->sbo", x_t, w,
                   preferred_element_type=jnp.float32,
                   precision=jax.lax.Precision.HIGHEST) + p["fc_b"]
    mu = y.mean(-1, keepdims=True)
    var = ((y - mu) ** 2).mean(-1, keepdims=True)
    y = (y - mu) / jnp.sqrt(var + 1e-12)
    return y * p["ln_gamma"] + p["ln_beta"]


if __name__ == "__main__":
    # Small synthetic shapes (TPU-lane-friendly): batch=2, seq=8, hidden=128, outdim=128.
    B, S, D, O = 2, 8, 128, 128

    key = jax.random.PRNGKey(0)
    k_x, k_p, k_x2 = jax.random.split(key, 3)

    # Synthetic DistilBERT last_hidden_state and attention mask.
    last_hidden_state = jax.random.normal(k_x, (B, S, D), dtype=jnp.float32)
    attention_mask = jnp.concatenate(
        [jnp.ones((B, S - 2), jnp.int32), jnp.zeros((B, 2), jnp.int32)], axis=1
    )
    params = init_params(k_p, D, O)

    # 1) Exact-numerics path (f32 matmul inputs) against a HIGHEST-precision ref.
    mask_out, text_memory, extra = text_encoder_forward(
        last_hidden_state, attention_mask, params, matmul_dtype=None
    )
    jax.block_until_ready(text_memory)
    ref = _reference(last_hidden_state, params)
    assert text_memory.shape == (S, B, O)
    assert mask_out.shape == (B, S) and mask_out.dtype == jnp.bool_
    assert extra is None
    assert jnp.allclose(text_memory, ref, atol=1e-4, rtol=1e-4)

    # 2) Default path (bf16 matmul inputs) with a sequence length that does not
    #    divide the tile, exercising the partial edge-block handling (no pad copy).
    S2 = 13
    x2 = jax.random.normal(k_x2, (B, S2, D), dtype=jnp.float32)
    mask2 = jnp.ones((B, S2), jnp.int32)
    _, tm2, _ = text_encoder_forward(x2, mask2, params)
    jax.block_until_ready(tm2)
    ref2 = _reference(x2, params, matmul_dtype=jnp.bfloat16)
    assert tm2.shape == (S2, B, O)
    assert jnp.allclose(tm2, ref2, atol=5e-2, rtol=5e-2)

    print("KERNEL_OK")
</pallas_src>

<mosaic_0001>
module attributes {stable_mosaic.version = 11 : i64} {
  func.func @_fc_layernorm_kernel(%arg0: i32, %arg1: i32, %arg2: memref<1x8x128xf32, #tpu.memory_space<vmem>>, %arg3: memref<128x128xf32, #tpu.memory_space<vmem>>, %arg4: memref<3x128xf32, #tpu.memory_space<vmem>>, %arg5: memref<8x128xf32, #tpu.memory_space<vmem>>) attributes {dimension_semantics = [#tpu.dimension_semantics<parallel>, #tpu.dimension_semantics<parallel>], iteration_bounds = array<i64: 1, 2>, scalar_prefetch = 0 : i64, scratch_operands = 0 : i64, tpu.core_type = #tpu.core_type<tc>, window_params = [{transform_indices = @transform_0, window_bounds = array<i64: 1, 8, 128>}, {pipeline_mode = #tpu.pipeline_mode<synchronous>, transform_indices = @transform_1, window_bounds = array<i64: 128, 128>}, {pipeline_mode = #tpu.pipeline_mode<synchronous>, transform_indices = @transform_2, window_bounds = array<i64: 3, 128>}, {transform_indices = @transform_3, window_bounds = array<i64: 8, 128>}]} {
    %c0 = arith.constant 0 : index
    %c0_0 = arith.constant 0 : index
    %c0_1 = arith.constant 0 : index
    %0 = vector.load %arg2[%c0, %c0_0, %c0_1] : memref<1x8x128xf32, #tpu.memory_space<vmem>>, vector<1x8x128xf32>
    %1 = vector.shape_cast %0 : vector<1x8x128xf32> to vector<8x128xf32>
    %c0_2 = arith.constant 0 : index
    %c0_3 = arith.constant 0 : index
    %2 = vector.load %arg3[%c0_2, %c0_3] : memref<128x128xf32, #tpu.memory_space<vmem>>, vector<128x128xf32>
    %cst = arith.constant dense<0.000000e+00> : vector<8x128xf32>
    %3 = tpu.matmul %1, %2, %cst {dimension_numbers = #tpu.dot_dimension_numbers<[1], [0], [0], [1], [0, 0, 1, 1], [], []>} : vector<8x128xf32>, vector<128x128xf32>, vector<8x128xf32> -> vector<8x128xf32>
    %c0_4 = arith.constant 0 : index
    %c0_5 = arith.constant 0 : index
    %4 = vector.load %arg4[%c0_4, %c0_5] : memref<3x128xf32, #tpu.memory_space<vmem>>, vector<3x128xf32>
    %5 = vector.extract_strided_slice %4 {offsets = [0, 0], sizes = [1, 128], strides = [1, 1]} : vector<3x128xf32> to vector<1x128xf32>
    %6 = vector.broadcast %5 : vector<1x128xf32> to vector<8x128xf32>
    %7 = arith.addf %3, %6 : vector<8x128xf32>
    %cst_6 = arith.constant dense<0.000000e+00> : vector<8xf32>
    %8 = vector.multi_reduction <add>, %7, %cst_6 [1] : vector<8x128xf32> to vector<8xf32>
    %9 = vector.shape_cast %8 : vector<8xf32> to vector<8x1xf32>
    %cst_7 = arith.constant 1.280000e+02 : f32
    %10 = vector.broadcast %cst_7 : f32 to vector<8x1xf32>
    %11 = arith.divf %9, %10 : vector<8x1xf32>
    %12 = arith.mulf %7, %7 : vector<8x128xf32>
    %cst_8 = arith.constant dense<0.000000e+00> : vector<8xf32>
    %13 = vector.multi_reduction <add>, %12, %cst_8 [1] : vector<8x128xf32> to vector<8xf32>
    %14 = vector.shape_cast %13 : vector<8xf32> to vector<8x1xf32>
    %cst_9 = arith.constant 1.280000e+02 : f32
    %15 = vector.broadcast %cst_9 : f32 to vector<8x1xf32>
    %16 = arith.divf %14, %15 : vector<8x1xf32>
    %17 = arith.mulf %11, %11 : vector<8x1xf32>
    %18 = arith.subf %16, %17 : vector<8x1xf32>
    %cst_10 = arith.constant 0.000000e+00 : f32
    %19 = vector.broadcast %cst_10 : f32 to vector<8x1xf32>
    %20 = arith.maximumf %18, %19 : vector<8x1xf32>
    %21 = vector.broadcast %11 : vector<8x1xf32> to vector<8x128xf32>
    %22 = arith.subf %7, %21 : vector<8x128xf32>
    %cst_11 = arith.constant 9.99999996E-13 : f32
    %23 = vector.broadcast %cst_11 : f32 to vector<8x1xf32>
    %24 = arith.addf %20, %23 : vector<8x1xf32>
    %25 = math.rsqrt %24 : vector<8x1xf32>
    %26 = vector.broadcast %25 : vector<8x1xf32> to vector<8x128xf32>
    %27 = arith.mulf %22, %26 : vector<8x128xf32>
    %28 = vector.extract_strided_slice %4 {offsets = [1, 0], sizes = [1, 128], strides = [1, 1]} : vector<3x128xf32> to vector<1x128xf32>
    %29 = vector.broadcast %28 : vector<1x128xf32> to vector<8x128xf32>
    %30 = arith.mulf %27, %29 : vector<8x128xf32>
    %31 = vector.extract_strided_slice %4 {offsets = [2, 0], sizes = [1, 128], strides = [1, 1]} : vector<3x128xf32> to vector<1x128xf32>
    %32 = vector.broadcast %31 : vector<1x128xf32> to vector<8x128xf32>
    %33 = arith.addf %30, %32 : vector<8x128xf32>
    %c0_12 = arith.constant 0 : index
    %c0_13 = arith.constant 0 : index
    %34 = vector.load %arg5[%c0_12, %c0_13] : memref<8x128xf32, #tpu.memory_space<vmem>>, vector<8x128xf32>
    tpu.vector_store %arg5[%c0_12, %c0_13], %33 {strides = array<i32>} : memref<8x128xf32, #tpu.memory_space<vmem>>, vector<8x128xf32>,
    return
  }
  func.func @transform_0(%arg0: i32, %arg1: i32) -> (i32, i32, i32) {
    %c0_i32 = arith.constant 0 : i32
    %c0_i32_0 = arith.constant 0 : i32
    return %arg1, %arg0, %c0_i32 : i32, i32, i32
  }
  func.func @transform_1(%arg0: i32, %arg1: i32) -> (i32, i32) {
    %c0_i32 = arith.constant 0 : i32
    %c0_i32_0 = arith.constant 0 : i32
    %c0_i32_1 = arith.constant 0 : i32
    return %c0_i32, %c0_i32_0 : i32, i32
  }
  func.func @transform_2(%arg0: i32, %arg1: i32) -> (i32, i32) {
    %c0_i32 = arith.constant 0 : i32
    %c0_i32_0 = arith.constant 0 : i32
    %c0_i32_1 = arith.constant 0 : i32
    return %c0_i32, %c0_i32_0 : i32, i32
  }
  func.func @transform_3(%arg0: i32, %arg1: i32) -> (i32, i32) {
    %c0_i32 = arith.constant 0 : i32
    return %arg0, %arg1 : i32, i32
  }
}

</mosaic_0001>

<llo_original>
// kernel: tpu_custom_call.1
$region0: #{tpu_custom_call.1}
  #allocation0 [shape = 'u32[]', space=smem, size = 0x4, offset = 0x4, fixed_abs, tag = 'smem constant byte address 0x4 - core index']
  #allocation1 [shape = 'u32[144,128]{1,0:T(1,128)}', space=vmem, size = 0x12000, scoped, tag = 'internal scratch']
  %s0 = inlined_call_operand.hbm [shape: f32[2,8,128], index: 0, kind: input, shape index: {}]
  %s1 = inlined_call_operand.hbm [shape: f32[128,128], index: 1, kind: input, shape index: {}]
  %s2 = inlined_call_operand.vmem [shape: f32[3,128], index: 2, kind: input, shape index: {}]
  %s3 = inlined_call_operand.hbm [shape: f32[8,256], index: 3, kind: output, shape index: {}]
  %s4 = sld [smem:[#allocation0]]
  $region53: #{tpu_custom_call.1} parent=0
    _
  %s6 = ssub.s32 1, %s4
  %s7 = scalar_select 0, %s6, %s4
  $region1: #{tpu_custom_call.1} parent=0
    #allocation2 [shape = 'u8[8192]{0}', space=vmem, size = 0x2000, scoped, tag = 'input window, operand 0']
    #allocation3 [shape = 's32[2]{0}', space=sflag, size = 0x8, scoped, tag = 'scoped memory for tpu_custom_call.1']
    #allocation4 [shape = 's32[2]{0}', space=sflag, size = 0x8, scoped, tag = 'scoped memory for tpu_custom_call.1']
    #allocation5 [shape = 'u8[65536]{0}', space=vmem, size = 0x10000, scoped, tag = 'input window, operand 1, single buffered']
    #allocation6 [shape = 's32[1]{0}', space=sflag, size = 0x4, scoped, tag = 'scoped memory for tpu_custom_call.1']
    #allocation7 [shape = 'u8[8192]{0}', space=vmem, size = 0x2000, scoped, tag = 'output window, operand 0']
    %8 = vsyncpa [#allocation3], 0
    %s9 = scalar_lea.sflag [#allocation3], 1
    %10 = vsyncpa %s9, 0
    %11 = vsyncpa [#allocation6], 0
    %12 = vsyncpa [#allocation4], 0
    %s13 = scalar_lea.sflag [#allocation4], 1
    %14 = vsyncpa %s13, 0
    loop: start=0, step=1, limit=4
    $region2: #{tpu_custom_call.1} parent=1 // loop_pre_header
      _
    $region3: #{tpu_custom_call.1} parent=1 // loop_header
      %s16 = sphi 0, %s20
      %p17 = scmp.ge.s32.totalorder %s16, 4
      %s23 = sphi 0, %s35
      %s24 = sphi 0, %s31
      %s25 = sphi 0, %s23
      %s26 = sphi 0, %s24
      %s27 = sphi 0, %s25
      %s28 = sphi 0, %s26
      %s40 = sphi 0, %s42
      %s43 = sphi 0, %s40
      %s44 = sphi 0, %s43
      %s60 = sphi 0, %s44
      %s64 = sphi 0, %s64
      %s66 = sphi 0, %s64
      %s67 = sphi 0, %s66
      %s81 = sphi 0, %s67
      %s85 = sphi 0, %s85
      %s87 = sphi 0, %s85
      %s88 = sphi 0, %s87
      %s102 = sphi 0, %s88
      %s110 = sphi 0, %s112
      %s113 = sphi 0, %s110
      %s114 = sphi 0, %s113
      %s130 = sphi 0, %s114
    $region4: #{tpu_custom_call.1} parent=1 // loop_header_branch
      %19 = sbr.rel (%p17) target = $region8
    $region5: #{tpu_custom_call.1} parent=1 // loop_body
      %s21 = ssub.s32 %s16, 1
      %s22 = ssub.s32 %s16, 2
      %s29 = sadd.s32 1, %s24
      %p30 = scmp.ge.s32.totalorder %s29, 2
      %s31 = scalar_select %p30, 0, %s29
      %s32 = sadd.s32 1, %s23
      %s33 = scalar_select %p30, %s32, %s23
      %p34 = scmp.ge.s32.totalorder %s33, 1
      %s35 = scalar_select %p34, 0, %s33
      %s36 = ssub.s32 %s24, %s31
      %s37 = ssub.s32 %s23, %s35
      %s38 = sor.u32 %s36, %s37
      %p39 = scmp.eq.s32.totalorder %s38, 0
      %s41 = sadd.s32 %s40, 1
      %s42 = scalar_select %p39, %s40, %s41
      %p45 = pneg %p39
      %p46 = scmp.eq.s32.totalorder %s16, 1
      %p47 = por %p45, %p46
      %p48 = scmp.ne.s32.totalorder %s40, %s43
      %p49 = scmp.eq.s32.totalorder %s16, 0
      %p50 = por %p48, %p49
      %p51 = scmp.ne.s32.totalorder %s40, %s43
      %p52 = scmp.eq.s32.totalorder %s21, 1
      %p53 = por %p51, %p52
      %p54 = scmp.ne.s32.totalorder %s43, %s44
      %p55 = scmp.eq.s32.totalorder %s21, 0
      %p56 = por %p54, %p55
      %p57 = scmp.ne.s32.totalorder %s43, %s44
      %p58 = scmp.eq.s32.totalorder %s22, 1
      %p59 = por %p57, %p58
      %p61 = scmp.ne.s32.totalorder %s44, %s60
      %p62 = scmp.eq.s32.totalorder %s22, 0
      %p63 = por %p61, %p62
      %s65 = sadd.s32 %s64, 1
      %p68 = scmp.eq.s32.totalorder %s16, 1
      %p69 = scmp.ne.s32.totalorder %s64, %s66
      %p70 = scmp.eq.s32.totalorder %s16, 0
      %p71 = por %p69, %p70
      %p72 = scmp.ne.s32.totalorder %s64, %s66
      %p73 = scmp.eq.s32.totalorder %s21, 1
      %p74 = por %p72, %p73
      %p75 = scmp.ne.s32.totalorder %s66, %s67
      %p76 = scmp.eq.s32.totalorder %s21, 0
      %p77 = por %p75, %p76
      %p78 = scmp.ne.s32.totalorder %s66, %s67
      %p79 = scmp.eq.s32.totalorder %s22, 1
      %p80 = por %p78, %p79
      %p82 = scmp.ne.s32.totalorder %s67, %s81
      %p83 = scmp.eq.s32.totalorder %s22, 0
      %p84 = por %p82, %p83
      %s86 = sadd.s32 %s85, 1
      %p89 = scmp.eq.s32.totalorder %s16, 1
      %p90 = scmp.ne.s32.totalorder %s85, %s87
      %p91 = scmp.eq.s32.totalorder %s16, 0
      %p92 = por %p90, %p91
      %p93 = scmp.ne.s32.totalorder %s85, %s87
      %p94 = scmp.eq.s32.totalorder %s21, 1
      %p95 = por %p93, %p94
      %p96 = scmp.ne.s32.totalorder %s87, %s88
      %p97 = scmp.eq.s32.totalorder %s21, 0
      %p98 = por %p96, %p97
      %p99 = scmp.ne.s32.totalorder %s87, %s88
      %p100 = scmp.eq.s32.totalorder %s22, 1
      %p101 = por %p99, %p100
      %p103 = scmp.ne.s32.totalorder %s88, %s102
      %p104 = scmp.eq.s32.totalorder %s22, 0
      %p105 = por %p103, %p104
      %s106 = ssub.s32 %s23, %s35
      %s107 = ssub.s32 %s24, %s31
      %s108 = sor.u32 %s106, %s107
      %p109 = scmp.eq.s32.totalorder %s108, 0
      %s111 = sadd.s32 %s110, 1
      %s112 = scalar_select %p109, %s110, %s111
      %p115 = pneg %p109
      %p116 = scmp.eq.s32.totalorder %s16, 1
      %p117 = por %p115, %p116
      %p118 = scmp.ne.s32.totalorder %s110, %s113
      %p119 = scmp.eq.s32.totalorder %s16, 0
      %p120 = por %p118, %p119
      %p121 = scmp.ne.s32.totalorder %s110, %s113
      %p122 = scmp.eq.s32.totalorder %s21, 1
      %p123 = por %p121, %p122
      %p124 = scmp.ne.s32.totalorder %s113, %s114
      %p125 = scmp.eq.s32.totalorder %s21, 0
      %p126 = por %p124, %p125
      %p127 = scmp.ne.s32.totalorder %s113, %s114
      %p128 = scmp.eq.s32.totalorder %s22, 1
      %p129 = por %p127, %p128
      %p131 = scmp.ne.s32.totalorder %s114, %s130
      %p132 = scmp.eq.s32.totalorder %s22, 0
      %p133 = por %p131, %p132
      %p134 = scmp.le.s32.totalorder 1, %s16
      %p135 = scmp.lt.s32.totalorder %s16, 3
      %p136 = pnand %p134, %p135
      %p137 = pneg %p136
      // Predicated region
      $region9: #{tpu_custom_call.1} parent=5 // pred_check
        _
      $region10: #{tpu_custom_call.1} parent=5 // pred_check_branch
        %139 = sbr.rel (%p136) target = $region12
      $region11: #{tpu_custom_call.1} parent=5 // pred_region
        %s140 = ssub.s32 %s16, 1
        // Predicated region
        $region13: #{tpu_custom_call.1} parent=11 // pred_check
          %p141 = pneg %p77
        $region14: #{tpu_custom_call.1} parent=11 // pred_check_branch
          %143 = sbr.rel (%p141) target = $region16
        $region15: #{tpu_custom_call.1} parent=11 // pred_region
          %s145 = ssub.s32 2048, 2048
          %146 = vsyncadd [#allocation6], %s145
          %s147 = sshll.u32 [#allocation5], 4
          %s148 = int_to_ptr.vmem [resolvable:$true] %s147
          %153 = dma.hbm_to_vmem [thread:$0]  %s1, 2048, %s148, [#allocation6], 128, 128, 8
        $region16: #{tpu_custom_call.1} parent=11 // pred_fallthru
          _
        // Predicated region
        $region17: #{tpu_custom_call.1} parent=11 // pred_check
          %p154 = pneg %p98
        $region18: #{tpu_custom_call.1} parent=11 // pred_check_branch
          %156 = sbr.rel (%p154) target = $region20
        $region19: #{tpu_custom_call.1} parent=11 // pred_region
          _
        $region20: #{tpu_custom_call.1} parent=11 // pred_fallthru
          _
      $region12: #{tpu_custom_call.1} parent=5 // pred_fallthru
        _
      %p157 = scmp.lt.s32.totalorder %s16, 2
      // Predicated region
      $region21: #{tpu_custom_call.1} parent=5 // pred_check
        %p158 = pneg %p157
      $region22: #{tpu_custom_call.1} parent=5 // pred_check_branch
        %160 = sbr.rel (%p158) target = $region24
      $region23: #{tpu_custom_call.1} parent=5 // pred_region
        // Predicated region
        $region25: #{tpu_custom_call.1} parent=23 // pred_check
          %p161 = pneg %p50
        $region26: #{tpu_custom_call.1} parent=23 // pred_check_branch
          %163 = sbr.rel (%p161) target = $region28
        $region27: #{tpu_custom_call.1} parent=23 // pred_region
          %s164 = sand.u32 %s40, 1
          %s165 = scalar_lea.sflag [#allocation3], %s164
          %s166 = sand.u32 %s40, 1
          %s167 = smul.addr %s166, 8
          %s168 = scalar_lea.vmem [#allocation2], %s167
          %s170 = ssub.s32 128, 128
          %171 = vsyncadd %s165, %s170
          %s172 = sadd.s32 %s23, %s24
          %s173 = smul.addr %s172, 128
          %s174 = scalar_lea.hbm %s0, %s173
          %s176 = sshll.u32 %s168, 4
          %s177 = int_to_ptr.vmem [resolvable:$true] %s176
          %179 = dma.hbm_to_vmem [thread:$0]  %s174, 128, %s177, %s165
        $region28: #{tpu_custom_call.1} parent=23 // pred_fallthru
          _
      $region24: #{tpu_custom_call.1} parent=5 // pred_fallthru
        _
      %p180 = scmp.le.s32.totalorder 1, %s16
      %p181 = scmp.lt.s32.totalorder %s16, 3
      %p182 = pnand %p180, %p181
      %p183 = pneg %p182
      // Predicated region
      $region29: #{tpu_custom_call.1} parent=5 // pred_check
        _
      $region30: #{tpu_custom_call.1} parent=5 // pred_check_branch
        %185 = sbr.rel (%p182) target = $region32
      $region31: #{tpu_custom_call.1} parent=5 // pred_region
        %s186 = ssub.s32 %s16, 1
        %s187 = sand.u32 %s43, 1
        %s188 = scalar_lea.sflag [#allocation3], %s187
        %s189 = sand.u32 %s43, 1
        %s190 = smul.addr %s189, 8
        %s191 = scalar_lea.vmem [#allocation2], %s190
        // Predicated region
        $region33: #{tpu_custom_call.1} parent=31 // pred_check
          %p192 = pneg %p56
        $region34: #{tpu_custom_call.1} parent=31 // pred_check_branch
          %194 = sbr.rel (%p192) target = $region36
        $region35: #{tpu_custom_call.1} parent=31 // pred_region
          %195 = dma.done %s188, 128
        $region36: #{tpu_custom_call.1} parent=31 // pred_fallthru
          _
        // Predicated region
        $region37: #{tpu_custom_call.1} parent=31 // pred_check
          %p196 = pneg %p77
        $region38: #{tpu_custom_call.1} parent=31 // pred_check_branch
          %198 = sbr.rel (%p196) target = $region40
        $region39: #{tpu_custom_call.1} parent=31 // pred_region
          %199 = dma.done [#allocation6], 2048
        $region40: #{tpu_custom_call.1} parent=31 // pred_fallthru
          _
        %s200 = sand.u32 %s43, 1
        %s201 = scalar_lea.sflag [#allocation3], %s200
        %s202 = sand.u32 %s43, 1
        %s203 = smul.addr %s202, 8
        %s204 = scalar_lea.vmem [#allocation2], %s203
        %p205 = pneg %p56
        %p206 = pneg %p53
        %p207 = pneg %p77
        %p208 = pneg %p74
        %p209 = pneg %p98
        %p210 = pneg %p95
        %p211 = pneg %p126
        %p212 = pneg %p123
        %s213 = sand.u32 %s113, 1
        %s214 = scalar_lea.sflag [#allocation4], %s213
        %s215 = sand.u32 %s113, 1
        %s216 = smul.addr %s215, 8
        %s217 = scalar_lea.vmem [#allocation7], %s216
        %v218 = vld [vmem:[%s191] sm:$0xff]
        %v219 = vld [vmem:[#allocation5] sm:$0xff]
        %v220 = vld [vmem:[#allocation5 + $0x8] sm:$0xff]
        %v221 = vld [vmem:[#allocation5 + $0x10] sm:$0xff]
        %v222 = vld [vmem:[#allocation5 + $0x18] sm:$0xff]
        %v223 = vld [vmem:[#allocation5 + $0x20] sm:$0xff]
        %v224 = vld [vmem:[#allocation5 + $0x28] sm:$0xff]
        %v225 = vld [vmem:[#allocation5 + $0x30] sm:$0xff]
        %v226 = vld [vmem:[#allocation5 + $0x38] sm:$0xff]
        %v227 = vld [vmem:[#allocation5 + $0x40] sm:$0xff]
        %v228 = vld [vmem:[#allocation5 + $0x48] sm:$0xff]
        %v229 = vld [vmem:[#allocation5 + $0x50] sm:$0xff]
        %v230 = vld [vmem:[#allocation5 + $0x58] sm:$0xff]
        %v231 = vld [vmem:[#allocation5 + $0x60] sm:$0xff]
        %v232 = vld [vmem:[#allocation5 + $0x68] sm:$0xff]
        %v233 = vld [vmem:[#allocation5 + $0x70] sm:$0xff]
        %v234 = vld [vmem:[#allocation5 + $0x78] sm:$0xff]
        %v235 = vld [vmem:[%s2] sm:$0x7]
        %v236 = vlaneseq
        %v237 = vshrl.u32 %v236, 7
        %v238 = vsub.s32 0, %v237
        %v239 = vrot.slane %v235, %v238
        %240 = vmatprep.subr.mxu0 0.0
        %241 = vmatpush1.msra.mxu0 %v219
        %242 = vmatprep.subr.mxu0 0.0
        %243 = vmatpush1.msra.mxu0 %v220
        %244 = vmatprep.subr.mxu0 0.0
        %245 = vmatpush1.msra.mxu0 %v221
        %246 = vmatprep.subr.mxu0 0.0
        %247 = vmatpush1.msra.mxu0 %v222
        %248 = vmatprep.subr.mxu0 0.0
        %249 = vmatpush1.msra.mxu0 %v223
        %250 = vmatprep.subr.mxu0 0.0
        %251 = vmatpush1.msra.mxu0 %v224
        %252 = vmatprep.subr.mxu0 0.0
        %253 = vmatpush1.msra.mxu0 %v225
        %254 = vmatprep.subr.mxu0 0.0
        %255 = vmatpush1.msra.mxu0 %v226
        %256 = vmatprep.subr.mxu0 0.0
        %257 = vmatpush1.msra.mxu0 %v227
        %258 = vmatprep.subr.mxu0 0.0
        %259 = vmatpush1.msra.mxu0 %v228
        %260 = vmatprep.subr.mxu0 0.0
        %261 = vmatpush1.msra.mxu0 %v229
        %262 = vmatprep.subr.mxu0 0.0
        %263 = vmatpush1.msra.mxu0 %v230
        %264 = vmatprep.subr.mxu0 0.0
        %265 = vmatpush1.msra.mxu0 %v231
        %266 = vmatprep.subr.mxu0 0.0
        %267 = vmatpush1.msra.mxu0 %v232
        %268 = vmatprep.subr.mxu0 0.0
        %269 = vmatpush1.msra.mxu0 %v233
        %270 = vmatprep.subr.mxu0 0.0
        %271 = vmatpush1.msra.mxu0 %v234
        %272 = vmatprep.subr.mxu0 0.0
        %273 = vmatpush1.msra.mxu0 0.0
        %274 = vmatprep.subr.mxu0 0.0
        %275 = vmatpush1.msra.mxu0 0.0
        %276 = vmatprep.subr.mxu0 0.0
        %277 = vmatpush1.msra.mxu0 0.0
        %278 = vmatprep.subr.mxu0 0.0
        %279 = vmatpush1.msra.mxu0 0.0
        %280 = vmatprep.subr.mxu0 0.0
        %281 = vmatpush1.msra.mxu0 0.0
        %282 = vmatprep.subr.mxu0 0.0
        %283 = vmatpush1.msra.mxu0 0.0
        %284 = vmatprep.subr.mxu0 0.0
        %285 = vmatpush1.msra.mxu0 0.0
        %286 = vmatprep.subr.mxu0 0.0
        %287 = vmatpush1.msra.mxu0 0.0
        %288 = vmatprep.subr.mxu0 0.0
        %289 = vmatpush1.msra.mxu0 0.0
        %290 = vmatprep.subr.mxu0 0.0
        %291 = vmatpush1.msra.mxu0 0.0
        %292 = vmatprep.subr.mxu0 0.0
        %293 = vmatpush1.msra.mxu0 0.0
        %294 = vmatprep.subr.mxu0 0.0
        %295 = vmatpush1.msra.mxu0 0.0
        %296 = vmatprep.subr.mxu0 0.0
        %297 = vmatpush1.msra.mxu0 0.0
        %298 = vmatprep.subr.mxu0 0.0
        %299 = vmatpush1.msra.mxu0 0.0
        %300 = vmatprep.subr.mxu0 0.0
        %301 = vmatpush1.msra.mxu0 0.0
        %302 = vmatprep.subr.mxu0 0.0
        %303 = vmatpush1.msra.mxu0 0.0
        %304 = vmatprep.mubr.f32.mxu0 0.0
        %305 = vmatmul.mubr.f32.gmra.mrb[0].mxu0 %v218
        %v306 = vpop.f32.mrb[0].mxu0
        %v307 = vadd.f32 %v239, %v306
        %v308 = vpop.f32.mrb[0].mxu0
        %309 = vdwg.mxu0
        %310 = vadd.xlane.f32.xlu0 %v307
        %v311 = vpop.xlane.xlu0 %310
        %v312 = vrcp.pop 128.0
        %v313 = vmul.f32 %v311, %v312
        %v314 = vmul.f32 %v307, %v307
        %315 = vadd.xlane.f32.xlu0 %v314
        %v316 = vpop.xlane.xlu0 %315
        %v317 = vmul.f32 %v316, %v312
        %v318 = vmul.f32 %v313, %v313
        %v319 = vsub.f32 %v317, %v318
        %v320 = vmax.f32 %v319, 0.0
        %v321 = vsub.f32 %v307, %v313
        %v322 = vadd.f32 %v320, 1e-12
        %v323 = vrsqrt.pop %v322
        %v324 = vmul.f32 %v321, %v323
        %v325 = vlaneseq
        %v326 = vshrl.u32 %v325, 7
        %v327 = vsub.s32 1, %v326
        %v328 = vrot.slane %v235, %v327
        %v329 = vmul.f32 %v324, %v328
        %v330 = vlaneseq
        %v331 = vshrl.u32 %v330, 7
        %v332 = vsub.s32 2, %v331
        %v333 = vrot.slane %v235, %v332
        %v334 = vadd.f32 %v329, %v333
        %335 = vst [vmem:[%s217] sm:$0xff] %v334
        %s336 = sand.u32 %s113, 1
        %s337 = scalar_lea.sflag [#allocation4], %s336
        %s338 = sand.u32 %s113, 1
        %s339 = smul.addr %s338, 8
        %s340 = scalar_lea.vmem [#allocation7], %s339
        // Predicated region
        $region41: #{tpu_custom_call.1} parent=31 // pred_check
          %p341 = pneg %p123
        $region42: #{tpu_custom_call.1} parent=31 // pred_check_branch
          %343 = sbr.rel (%p341) target = $region44
        $region43: #{tpu_custom_call.1} parent=31 // pred_region
          %s345 = ssub.s32 128, 128
          %346 = vsyncadd %s337, %s345
          %s347 = smul.addr %s25, 2
          %s348 = sadd.s32 %s26, %s347
          %s349 = smul.addr %s348, 128
          %s350 = scalar_lea.hbm %s3, %s349
          %s352 = sshll.u32 %s340, 4
          %s353 = int_to_ptr.vmem [resolvable:$true] %s352
          %355 = dma.vmem_to_hbm [thread:$0]  %s353, 128, %s350, %s337
        $region44: #{tpu_custom_call.1} parent=31 // pred_fallthru
          _
      $region32: #{tpu_custom_call.1} parent=5 // pred_fallthru
        _
      %p356 = scmp.le.s32.totalorder 2, %s16
      // Predicated region
      $region45: #{tpu_custom_call.1} parent=5 // pred_check
        %p357 = pneg %p356
      $region46: #{tpu_custom_call.1} parent=5 // pred_check_branch
        %359 = sbr.rel (%p357) target = $region48
      $region47: #{tpu_custom_call.1} parent=5 // pred_region
        %s360 = ssub.s32 %s16, 2
        // Predicated region
        $region49: #{tpu_custom_call.1} parent=47 // pred_check
          %p361 = pneg %p129
        $region50: #{tpu_custom_call.1} parent=47 // pred_check_branch
          %363 = sbr.rel (%p361) target = $region52
        $region51: #{tpu_custom_call.1} parent=47 // pred_region
          %s364 = sand.u32 %s114, 1
          %s365 = scalar_lea.sflag [#allocation4], %s364
          %s366 = sand.u32 %s114, 1
          %s367 = smul.addr %s366, 8
          %s368 = scalar_lea.vmem [#allocation7], %s367
          %369 = dma.done %s365, 128
        $region52: #{tpu_custom_call.1} parent=47 // pred_fallthru
          _
      $region48: #{tpu_custom_call.1} parent=5 // pred_fallthru
        _
    $region6: #{tpu_custom_call.1} parent=1 // loop_footer
      %s20 = sadd.s32 1, %s16
    $region7: #{tpu_custom_call.1} parent=1 // loop_footer_branch
      %15 = sbr.rel target = $region3
    $region8: #{tpu_custom_call.1} parent=1 // loop_exit
      _
    %370 = vsyncpa [#allocation3], 1
    %s371 = scalar_lea.sflag [#allocation3], 1
    %372 = vsyncpa %s371, 1
    %373 = vsyncpa [#allocation6], 1
    %374 = vsyncpa [#allocation4], 1
    %s375 = scalar_lea.sflag [#allocation4], 1
    %376 = vsyncpa %s375, 1

</llo_original>
